<compile_context>
chip_gen: v7x
topology: tpu7x:2x2x1
jax: 0.10.0
libtpu: 0.0.40
codegen_flags: <defaults>
</compile_context>

<pallas_src>
import jax
import jax.numpy as jnp
from jax import lax
from jax.experimental import pallas as pl
from jax.experimental.pallas import tpu as pltpu

# ---------------- configuration (mirrors the nn.Module __init__ args) --------
B = 2            # demo batch
L = 16           # input_size
C1, K1 = 4, 3    # conv block 0: Conv1d(in=1, out=4, kernel_size=3), MaxPool1d(2)
C2, K2 = 8, 3    # conv block 1: Conv1d(in=4, out=8, kernel_size=3), MaxPool1d(2)
OUT = 1          # out_size
BN_EPS = 1e-5

L1 = L - K1 + 1          # 14  (conv1 output length)
P1 = L1 // 2             # 7   (after maxpool1, k=s=2)
L2 = P1 - K2 + 1         # 5   (conv2 output length)
P2 = L2 // 2             # 2   (after maxpool2) -> fc in_features = C2*P2 = 16

P1C1 = P1 * C1           # 28 : conv1 pooled feature width per parity
PSTRIDE1 = 32            # conv1 parity stride padded to a multiple of 8 sublanes
CW1P = 2 * PSTRIDE1      # 64 : conv1 matmul output rows ([even | pad | odd | pad])
CW2 = 2 * P2 * C2        # 32 : conv2 matmul output rows ([even | odd])
NFC = P2 * C2            # 16 : fc in_features (row layout: [tp2, c2])

# ---- packed parameter slab: one (64, 384) f32 array, three 128-lane regions --
SLAB_R, SLAB_C = 64, 384
W1_C, W2_C, FC_C = 0, 128, 256    # every weight block starts at lane 0 of its region


# ------------------------------ Pallas kernel --------------------------------
def cnn_kernel(x_ref, p_ref, o_ref):
    xt = x_ref[...]                                          # (L, TB) batch on lanes

    # parameter slices (static; each MXU-fed weight is lane-0 / sublane-0 aligned)
    w1 = p_ref[0:CW1P, W1_C:W1_C + L]                        # (64, 16) conv1+BN Toeplitz^T
    b1 = p_ref[0:CW1P, W1_C + L:W1_C + L + 1]                # (64, 1)
    w2 = p_ref[0:CW2, W2_C:W2_C + P1C1]                      # (32, 28) conv2 im2col^T
    b2 = p_ref[0:CW2, W2_C + P1C1:W2_C + P1C1 + 1]           # (32, 1)
    wfc = p_ref[0:NFC, FC_C:FC_C + 1]                        # (16, 1)
    bfc = p_ref[NFC:NFC + 1, FC_C:FC_C + 1]                  # (1, 1)

    # conv block 0: Conv1d(1->4) + folded eval-BN + ReLU, one MXU matmul,
    # bf16 operands / f32 accumulation when compute dtype is bf16.
    # Dropout is inference identity.
    # TODO(synk): training-mode stochastic Dropout is not implemented.
    h1 = jnp.dot(w1.astype(xt.dtype), xt, preferred_element_type=jnp.float32) + b1
    h1 = jnp.maximum(h1, 0.0)                                # (64, TB)
    # MaxPool1d(2): rows are [even-times | pad | odd-times | pad]; both pool
    # operands start on a sublane-tile boundary (0 and 32).
    p1 = jnp.maximum(h1[0:P1C1, :], h1[PSTRIDE1:PSTRIDE1 + P1C1, :])    # (28, TB)

    # conv block 1: Conv1d(4->8) + ReLU, one matmul over im2col'd weights
    # (conv2's last timestep, dropped by MaxPool1d floor, is never computed).
    h2 = jnp.maximum(jnp.dot(w2, p1, preferred_element_type=jnp.float32) + b2, 0.0)
    p2 = jnp.maximum(h2[0:NFC, :], h2[NFC:, :])              # (16, TB)

    # Flatten + Linear(16->1): VPU multiply + sublane reduce (no degenerate
    # 1-wide MXU op), then sigmoid = exp (EUP) + approximate reciprocal (EUP).
    logits = jnp.sum(p2 * wfc, axis=0, keepdims=True) + bfc  # (1, TB)
    o_ref[...] = pl.reciprocal(1.0 + jnp.exp(-logits), approx=True)


def _round_up(n, m):
    return ((n + m - 1) // m) * m


def statistics_cnn_1d(x, param_slab, *, tb=16384, compute_dtype=jnp.bfloat16):
    """Fused StatisticsCNN1D forward.  x: (B, input_size) f32 -> (B, 1) f32."""
    bsz, lin = x.shape
    assert lin == L
    # Batch tile: default sized for the HBM roofline (MiB-scale x tiles); must be
    # a multiple of 128 lanes.  Clamped down for tiny demo batches.
    tb = min(tb, _round_up(bsz, 128))
    bpad = _round_up(bsz, tb)

    # Batch-on-lanes layout (wrapper-side layout plumbing): transpose so the big
    # axis (batch) sits on lanes; every intermediate and the output are lane-dense.
    xt = jnp.pad(x, ((0, bpad - bsz), (0, 0))).astype(compute_dtype).T   # (L, bpad)

    out = pl.pallas_call(
        cnn_kernel,
        out_shape=jax.ShapeDtypeStruct((1, bpad), jnp.float32),
        grid_spec=pltpu.PrefetchScalarGridSpec(
            num_scalar_prefetch=0,
            grid=(bpad // tb,),
            in_specs=[
                # stream x in (L, TB) tiles along the batch axis
                pl.BlockSpec((L, tb), lambda b: (0, b)),
                # ~96 KiB param slab: constant index -> DMA'd once, VMEM-resident
                pl.BlockSpec((SLAB_R, SLAB_C), lambda b: (0, 0)),
            ],
            out_specs=pl.BlockSpec((1, tb), lambda b: (0, b)),   # lane-dense store
        ),
        # "parallel" shards batch tiles across the 2 TensorCores on v7x; no-op on
        # v5e/v6e.  Peak VMEM at tb=16384 is ~8 MiB (< 32 MiB scoped default on
        # all generations), so no explicit vmem_limit_bytes needed.
        compiler_params=pltpu.CompilerParams(dimension_semantics=("parallel",)),
    )(xt, param_slab)

    return out[0, :bsz, None]                                    # (B, 1)


# --------------------------- parameter construction --------------------------
def make_params(key):
    ks = jax.random.split(key, 10)
    # torch-shaped parameters (deterministic)
    w1_t = jax.random.normal(ks[0], (C1, 1, K1), jnp.float32) * 0.3   # conv1.weight
    b1_t = jax.random.normal(ks[1], (C1,), jnp.float32) * 0.1         # conv1.bias
    gamma = jax.random.uniform(ks[2], (C1,), jnp.float32, 0.5, 1.5)   # bn.weight
    beta = jax.random.normal(ks[3], (C1,), jnp.float32) * 0.1         # bn.bias
    rmean = jax.random.normal(ks[4], (C1,), jnp.float32) * 0.1        # bn.running_mean
    rvar = jax.random.uniform(ks[5], (C1,), jnp.float32, 0.5, 1.5)    # bn.running_var
    w2_t = jax.random.normal(ks[6], (C2, C1, K2), jnp.float32) * 0.2  # conv2.weight
    b2_t = jax.random.normal(ks[7], (C2,), jnp.float32) * 0.1         # conv2.bias
    wfc_t = jax.random.normal(ks[8], (OUT, C2 * P2), jnp.float32) * 0.2  # fc.weight
    bfc_t = jax.random.normal(ks[9], (OUT,), jnp.float32) * 0.1          # fc.bias

    torch_params = (w1_t, b1_t, gamma, beta, rmean, rvar, w2_t, b2_t, wfc_t, bfc_t)

    # ---- fold eval-mode BatchNorm1d into conv1 weight/bias ------------------
    scale = gamma / jnp.sqrt(rvar + BN_EPS)                    # (C1,)
    w1f = w1_t[:, 0, :] * scale[:, None]                       # (C1, K1)
    b1f = (b1_t - rmean) * scale + beta                        # (C1,)

    # ---- conv1 as a Toeplitz matmul weight, [even | odd] time layout --------
    # row (after transpose) = parity*PSTRIDE1 + tp*C1 + c ; conv time t = 2*tp+parity
    li = jnp.arange(L).reshape(L, 1, 1, 1)
    par = jnp.arange(2).reshape(1, 2, 1, 1)
    tpp = jnp.arange(P1).reshape(1, 1, P1, 1)
    cc = jnp.arange(C1).reshape(1, 1, 1, C1)
    k1i = li - (2 * tpp + par)
    w1blk = jnp.where((k1i >= 0) & (k1i < K1),
                      w1f[cc, jnp.clip(k1i, 0, K1 - 1)], 0.0).reshape(L, 2, P1C1)
    # pad the per-parity block from 28 to 32 rows so pool halves are tile-aligned
    w1mat = jnp.pad(w1blk, ((0, 0), (0, 0), (0, PSTRIDE1 - P1C1))).reshape(L, CW1P)
    b1row = jnp.tile(jnp.pad(jnp.tile(b1f, P1), (0, PSTRIDE1 - P1C1)), 2)   # (64,)

    # ---- conv2 as an im2col matmul weight over the pooled conv1 output ------
    # row = parity2*P2*C2 + tp2*C2 + c2 (after transpose); col = tp1*C1 + c1
    # (conv2 timestep t2 = 4 is dropped by MaxPool1d floor -> never built)
    t1 = jnp.arange(P1).reshape(P1, 1, 1, 1, 1)
    c1i = jnp.arange(C1).reshape(1, C1, 1, 1, 1)
    par2 = jnp.arange(2).reshape(1, 1, 2, 1, 1)
    t2 = jnp.arange(P2).reshape(1, 1, 1, P2, 1)
    c2i = jnp.arange(C2).reshape(1, 1, 1, 1, C2)
    k2i = t1 - (2 * t2 + par2)
    w2mat = jnp.where((k2i >= 0) & (k2i < K2),
                      w2_t[c2i, c1i, jnp.clip(k2i, 0, K2 - 1)],
                      0.0).reshape(P1C1, CW2)                  # (28, 32)
    b2row = jnp.tile(b2_t, 2 * P2)                             # (32,)

    # ---- fc weight permuted from torch channel-major flatten to [tp2, c2] ---
    wfccol = jnp.transpose(wfc_t.reshape(OUT, C2, P2), (2, 1, 0)).reshape(NFC, OUT)

    # ---- pack everything into one (64, 384) slab (single ~96 KiB DMA);
    #      each MXU-fed weight starts at lane 0 / sublane 0 of its own region --
    slab = jnp.zeros((SLAB_R, SLAB_C), jnp.float32)
    slab = slab.at[0:CW1P, W1_C:W1_C + L].set(w1mat.T)         # W1^T (64, 16)
    slab = slab.at[0:CW1P, W1_C + L].set(b1row)                # b1 column
    slab = slab.at[0:CW2, W2_C:W2_C + P1C1].set(w2mat.T)       # W2^T (32, 28)
    slab = slab.at[0:CW2, W2_C + P1C1].set(b2row)              # b2 column
    slab = slab.at[0:NFC, FC_C].set(wfccol[:, 0])              # fc weight column
    slab = slab.at[NFC, FC_C].set(bfc_t[0])                    # fc bias scalar

    return torch_params, slab


# ----------------------- pure-JAX reference (PyTorch semantics) ---------------
def ref_forward(x, torch_params):
    (w1_t, b1_t, gamma, beta, rmean, rvar, w2_t, b2_t, wfc_t, bfc_t) = torch_params
    h = x[:, None, :]                                            # (B, 1, L)  NCL
    h = lax.conv_general_dilated(h, w1_t, (1,), 'VALID',
                                 dimension_numbers=('NCH', 'OIH', 'NCH'))
    h = h + b1_t[None, :, None]
    h = (h - rmean[None, :, None]) / jnp.sqrt(rvar + BN_EPS)[None, :, None]
    h = h * gamma[None, :, None] + beta[None, :, None]
    h = jnp.maximum(h, 0.0)
    h = lax.reduce_window(h, -jnp.inf, lax.max, (1, 1, 2), (1, 1, 2), 'VALID')
    h = lax.conv_general_dilated(h, w2_t, (1,), 'VALID',
                                 dimension_numbers=('NCH', 'OIH', 'NCH'))
    h = h + b2_t[None, :, None]
    h = jnp.maximum(h, 0.0)
    h = lax.reduce_window(h, -jnp.inf, lax.max, (1, 1, 2), (1, 1, 2), 'VALID')
    flat = h.reshape(h.shape[0], -1)                             # channel-major flatten
    out = flat @ wfc_t.T + bfc_t[None, :]
    return jax.nn.sigmoid(out)


if __name__ == "__main__":
    key = jax.random.PRNGKey(0)
    kx, kp = jax.random.split(key)
    x = jax.random.normal(kx, (B, L), jnp.float32)               # input_ids: (batch, input_size)

    torch_params, param_slab = make_params(kp)
    ref = ref_forward(x, torch_params)

    # f32-input path (baseline numerics; approx-reciprocal sigmoid epilogue)
    out_f32 = jax.block_until_ready(
        statistics_cnn_1d(x, param_slab, compute_dtype=jnp.float32))
    assert out_f32.shape == (B, OUT)
    assert jnp.allclose(out_f32, ref, rtol=5e-3, atol=5e-3), (out_f32, ref)

    # bf16-input path (recommended on v6e/v7x: halves HBM traffic, f32 accumulation)
    out_bf16 = jax.block_until_ready(
        statistics_cnn_1d(x, param_slab, compute_dtype=jnp.bfloat16))
    assert out_bf16.shape == (B, OUT)
    assert jnp.allclose(out_bf16, ref, rtol=3e-2, atol=3e-2), (out_bf16, ref)

    print("KERNEL_OK")
</pallas_src>

<mosaic_0001>
module attributes {stable_mosaic.version = 11 : i64} {
  func.func @cnn_kernel(%arg0: i32, %arg1: memref<16x128xf32, #tpu.memory_space<vmem>>, %arg2: memref<64x384xf32, #tpu.memory_space<vmem>>, %arg3: memref<1x128xf32, #tpu.memory_space<vmem>>) attributes {dimension_semantics = [#tpu.dimension_semantics<parallel>], iteration_bounds = array<i64: 1>, scalar_prefetch = 0 : i64, scratch_operands = 0 : i64, tpu.core_type = #tpu.core_type<tc>, window_params = [{transform_indices = @transform_0, window_bounds = array<i64: 16, 128>}, {pipeline_mode = #tpu.pipeline_mode<synchronous>, transform_indices = @transform_1, window_bounds = array<i64: 64, 384>}, {transform_indices = @transform_2, window_bounds = array<i64: 1, 128>}]} {
    %c0 = arith.constant 0 : index
    %c0_0 = arith.constant 0 : index
    %0 = vector.load %arg1[%c0, %c0_0] : memref<16x128xf32, #tpu.memory_space<vmem>>, vector<16x128xf32>
    %c0_1 = arith.constant 0 : index
    %c0_2 = arith.constant 0 : index
    %1 = vector.load %arg2[%c0_1, %c0_2] : memref<64x384xf32, #tpu.memory_space<vmem>>, vector<64x16xf32>
    %c0_3 = arith.constant 0 : index
    %c16 = arith.constant 16 : index
    %2 = vector.load %arg2[%c0_3, %c16] : memref<64x384xf32, #tpu.memory_space<vmem>>, vector<64x1xf32>
    %c0_4 = arith.constant 0 : index
    %c128 = arith.constant 128 : index
    %3 = vector.load %arg2[%c0_4, %c128] : memref<64x384xf32, #tpu.memory_space<vmem>>, vector<32x28xf32>
    %c0_5 = arith.constant 0 : index
    %c156 = arith.constant 156 : index
    %4 = vector.load %arg2[%c0_5, %c156] : memref<64x384xf32, #tpu.memory_space<vmem>>, vector<32x1xf32>
    %c0_6 = arith.constant 0 : index
    %c256 = arith.constant 256 : index
    %5 = vector.load %arg2[%c0_6, %c256] : memref<64x384xf32, #tpu.memory_space<vmem>>, vector<16x1xf32>
    %c16_7 = arith.constant 16 : index
    %c256_8 = arith.constant 256 : index
    %6 = vector.load %arg2[%c16_7, %c256_8] : memref<64x384xf32, #tpu.memory_space<vmem>>, vector<1x1xf32>
    %cst = arith.constant dense<0.000000e+00> : vector<64x128xf32>
    %7 = tpu.matmul %1, %0, %cst {dimension_numbers = #tpu.dot_dimension_numbers<[1], [0], [0], [1], [0, 0, 1, 1], [], []>} : vector<64x16xf32>, vector<16x128xf32>, vector<64x128xf32> -> vector<64x128xf32>
    %8 = vector.broadcast %2 : vector<64x1xf32> to vector<64x128xf32>
    %9 = arith.addf %7, %8 : vector<64x128xf32>
    %cst_9 = arith.constant 0.000000e+00 : f32
    %10 = vector.broadcast %cst_9 : f32 to vector<64x128xf32>
    %11 = arith.maximumf %9, %10 : vector<64x128xf32>
    %12 = vector.extract_strided_slice %11 {offsets = [0, 0], sizes = [28, 128], strides = [1, 1]} : vector<64x128xf32> to vector<28x128xf32>
    %13 = vector.extract_strided_slice %11 {offsets = [32, 0], sizes = [28, 128], strides = [1, 1]} : vector<64x128xf32> to vector<28x128xf32>
    %14 = arith.maximumf %12, %13 : vector<28x128xf32>
    %cst_10 = arith.constant dense<0.000000e+00> : vector<32x128xf32>
    %15 = tpu.matmul %3, %14, %cst_10 {dimension_numbers = #tpu.dot_dimension_numbers<[1], [0], [0], [1], [0, 0, 1, 1], [], []>} : vector<32x28xf32>, vector<28x128xf32>, vector<32x128xf32> -> vector<32x128xf32>
    %16 = vector.broadcast %4 : vector<32x1xf32> to vector<32x128xf32>
    %17 = arith.addf %15, %16 : vector<32x128xf32>
    %cst_11 = arith.constant 0.000000e+00 : f32
    %18 = vector.broadcast %cst_11 : f32 to vector<32x128xf32>
    %19 = arith.maximumf %17, %18 : vector<32x128xf32>
    %20 = vector.extract_strided_slice %19 {offsets = [0, 0], sizes = [16, 128], strides = [1, 1]} : vector<32x128xf32> to vector<16x128xf32>
    %21 = vector.extract_strided_slice %19 {offsets = [16, 0], sizes = [16, 128], strides = [1, 1]} : vector<32x128xf32> to vector<16x128xf32>
    %22 = arith.maximumf %20, %21 : vector<16x128xf32>
    %23 = vector.broadcast %5 : vector<16x1xf32> to vector<16x128xf32>
    %24 = arith.mulf %22, %23 : vector<16x128xf32>
    %cst_12 = arith.constant dense<0.000000e+00> : vector<128xf32>
    %25 = vector.multi_reduction <add>, %24, %cst_12 [0] : vector<16x128xf32> to vector<128xf32>
    %26 = vector.shape_cast %25 : vector<128xf32> to vector<1x128xf32>
    %27 = vector.broadcast %6 : vector<1x1xf32> to vector<1x128xf32>
    %28 = arith.addf %26, %27 : vector<1x128xf32>
    %cst_13 = arith.constant 0.000000e+00 : f32
    %29 = vector.broadcast %cst_13 : f32 to vector<1x128xf32>
    %30 = arith.subf %29, %28 : vector<1x128xf32>
    %31 = math.exp %30 : vector<1x128xf32>
    %cst_14 = arith.constant 1.000000e+00 : f32
    %32 = vector.broadcast %cst_14 : f32 to vector<1x128xf32>
    %33 = arith.addf %32, %31 : vector<1x128xf32>
    %34 = tpu.reciprocal %33 {approx = true} : vector<1x128xf32> -> vector<1x128xf32>
    %c0_15 = arith.constant 0 : index
    %c0_16 = arith.constant 0 : index
    %35 = vector.load %arg3[%c0_15, %c0_16] : memref<1x128xf32, #tpu.memory_space<vmem>>, vector<1x128xf32>
    tpu.vector_store %arg3[%c0_15, %c0_16], %34 {strides = array<i32>} : memref<1x128xf32, #tpu.memory_space<vmem>>, vector<1x128xf32>,
    return
  }
  func.func @transform_0(%arg0: i32) -> (i32, i32) {
    %c0_i32 = arith.constant 0 : i32
    %c0_i32_0 = arith.constant 0 : i32
    return %c0_i32, %arg0 : i32, i32
  }
  func.func @transform_1(%arg0: i32) -> (i32, i32) {
    %c0_i32 = arith.constant 0 : i32
    %c0_i32_0 = arith.constant 0 : i32
    %c0_i32_1 = arith.constant 0 : i32
    return %c0_i32, %c0_i32_0 : i32, i32
  }
  func.func @transform_2(%arg0: i32) -> (i32, i32) {
    %c0_i32 = arith.constant 0 : i32
    %c0_i32_0 = arith.constant 0 : i32
    return %c0_i32, %arg0 : i32, i32
  }
}

</mosaic_0001>

<llo_original>
// kernel: tpu_custom_call.1
$region0: #{tpu_custom_call.1}
  #allocation0 [shape = 'u32[]', space=smem, size = 0x4, offset = 0x4, fixed_abs, tag = 'smem constant byte address 0x4 - core index']
  #allocation1 [shape = 'u32[144,128]{1,0:T(1,128)}', space=vmem, size = 0x12000, scoped, tag = 'internal scratch']
  %s0 = inlined_call_operand.hbm [shape: f32[16,128], index: 0, kind: input, shape index: {}]
  %s1 = inlined_call_operand.hbm [shape: f32[64,384], index: 1, kind: input, shape index: {}]
  %s2 = inlined_call_operand.hbm [shape: f32[1,128], index: 2, kind: output, shape index: {}]
  %s3 = sld [smem:[#allocation0]]
  $region26: #{tpu_custom_call.1} parent=0
    _
  %s5 = ssub.s32 1, %s3
  %s6 = scalar_select 0, %s5, %s3
  $region1: #{tpu_custom_call.1} parent=0
    #allocation2 [shape = 'u8[8192]{0}', space=vmem, size = 0x2000, scoped, tag = 'input window, operand 0, single buffered']
    #allocation3 [shape = 's32[1]{0}', space=sflag, size = 0x4, scoped, tag = 'scoped memory for tpu_custom_call.1']
    #allocation4 [shape = 's32[1]{0}', space=sflag, size = 0x4, scoped, tag = 'scoped memory for tpu_custom_call.1']
    #allocation5 [shape = 'u8[98304]{0}', space=vmem, size = 0x18000, scoped, tag = 'input window, operand 1, single buffered']
    #allocation6 [shape = 's32[1]{0}', space=sflag, size = 0x4, scoped, tag = 'scoped memory for tpu_custom_call.1']
    #allocation7 [shape = 'u8[512]{0}', space=vmem, size = 0x400, scoped, tag = 'output window, operand 0, single buffered']
    %7 = vsyncpa [#allocation3], 0
    %8 = vsyncpa [#allocation6], 0
    %9 = vsyncpa [#allocation4], 0
    // Predicated region
    $region2: #{tpu_custom_call.1} parent=1 // pred_check
      _
    $region3: #{tpu_custom_call.1} parent=1 // pred_check_branch
      %11 = sbr.rel (0) target = $region5
    $region4: #{tpu_custom_call.1} parent=1 // pred_region
      %s13 = ssub.s32 256, 256
      %14 = vsyncadd [#allocation3], %s13
      %s15 = sshll.u32 [#allocation2], 4
      %s16 = int_to_ptr.vmem [resolvable:$true] %s15
      %21 = dma.hbm_to_vmem [thread:$0]  %s0, 256, %s16, [#allocation3], 128, 128, 8
    $region5: #{tpu_custom_call.1} parent=1 // pred_fallthru
      _
    // Predicated region
    $region6: #{tpu_custom_call.1} parent=1 // pred_check
      _
    $region7: #{tpu_custom_call.1} parent=1 // pred_check_branch
      %23 = sbr.rel (0) target = $region9
    $region8: #{tpu_custom_call.1} parent=1 // pred_region
      %s25 = ssub.s32 3072, 3072
      %26 = vsyncadd [#allocation6], %s25
      %s27 = sshll.u32 [#allocation5], 4
      %s28 = int_to_ptr.vmem [resolvable:$true] %s27
      %33 = dma.hbm_to_vmem [thread:$0]  %s1, 3072, %s28, [#allocation6], 384, 384, 24
    $region9: #{tpu_custom_call.1} parent=1 // pred_fallthru
      _
    // Predicated region
    $region10: #{tpu_custom_call.1} parent=1 // pred_check
      _
    $region11: #{tpu_custom_call.1} parent=1 // pred_check_branch
      %35 = sbr.rel (0) target = $region13
    $region12: #{tpu_custom_call.1} parent=1 // pred_region
      %36 = dma.done [#allocation3], 256
    $region13: #{tpu_custom_call.1} parent=1 // pred_fallthru
      _
    // Predicated region
    $region14: #{tpu_custom_call.1} parent=1 // pred_check
      _
    $region15: #{tpu_custom_call.1} parent=1 // pred_check_branch
      %38 = sbr.rel (0) target = $region17
    $region16: #{tpu_custom_call.1} parent=1 // pred_region
      %39 = dma.done [#allocation6], 3072
    $region17: #{tpu_custom_call.1} parent=1 // pred_fallthru
      _
    %v40 = vld [vmem:[#allocation2] sm:$0xff]
    %v41 = vld [vmem:[#allocation2 + $0x8] sm:$0xff]
    %v42 = vld [vmem:[#allocation5] sm:$0xff]
    %v43 = vld [vmem:[#allocation5 + $0x18] sm:$0xff]
    %v44 = vld [vmem:[#allocation5 + $0x30] sm:$0xff]
    %v45 = vld [vmem:[#allocation5 + $0x48] sm:$0xff]
    %v46 = vld [vmem:[#allocation5 + $0x60] sm:$0xff]
    %v47 = vld [vmem:[#allocation5 + $0x78] sm:$0xff]
    %v48 = vld [vmem:[#allocation5 + $0x90] sm:$0xff]
    %v49 = vld [vmem:[#allocation5 + $0xa8] sm:$0xff]
    %v50 = vld [vmem:[#allocation5 + $0x8] sm:$0xff]
    %v51 = vld [vmem:[#allocation5 + $0x20] sm:$0xff]
    %v52 = vld [vmem:[#allocation5 + $0x38] sm:$0xff]
    %v53 = vld [vmem:[#allocation5 + $0x50] sm:$0xff]
    %v54 = vld [vmem:[#allocation5 + $0x10] sm:$0xff]
    %v55 = vld [vmem:[#allocation5 + $0x28] sm:$0xff]
    %v56 = vld [vmem:[#allocation5 + $0x40] ss:$0 sm:$0xff]
    %58 = vset.pattern.permute.xlu0 16
    %59 = vperm.xlu0 %58, %v42
    %v60 = vpop.permute.xlu0 %59
    %63 = vset.pattern.permute.xlu0 16
    %64 = vperm.xlu0 %63, %v43
    %v65 = vpop.permute.xlu0 %64
    %68 = vset.pattern.permute.xlu0 16
    %69 = vperm.xlu0 %68, %v44
    %v70 = vpop.permute.xlu0 %69
    %73 = vset.pattern.permute.xlu0 16
    %74 = vperm.xlu0 %73, %v45
    %v75 = vpop.permute.xlu0 %74
    %78 = vset.pattern.permute.xlu0 16
    %79 = vperm.xlu0 %78, %v46
    %v80 = vpop.permute.xlu0 %79
    %83 = vset.pattern.permute.xlu0 16
    %84 = vperm.xlu0 %83, %v47
    %v85 = vpop.permute.xlu0 %84
    %88 = vset.pattern.permute.xlu0 16
    %89 = vperm.xlu0 %88, %v48
    %v90 = vpop.permute.xlu0 %89
    %93 = vset.pattern.permute.xlu0 16
    %94 = vperm.xlu0 %93, %v49
    %v95 = vpop.permute.xlu0 %94
    %vm97 = vcmask 130048
    %v98 = vsel %vm97, %v42, 0
    %v100 = vsel %vm97, %v43, 0
    %v102 = vsel %vm97, %v44, 0
    %v104 = vsel %vm97, %v45, 0
    %v106 = vsel %vm97, %v46, 0
    %v108 = vsel %vm97, %v47, 0
    %v110 = vsel %vm97, %v48, 0
    %v112 = vsel %vm97, %v49, 0
    %114 = vmatprep.subr.mxu0 0.0
    %115 = vmatpush1.msra.mxu0 %v40
    %116 = vmatprep.subr.mxu0 0.0
    %117 = vmatpush1.msra.mxu0 %v41
    %118 = vmatprep.subr.mxu0 0.0
    %119 = vmatpush1.msra.mxu0 0.0
    %120 = vmatprep.subr.mxu0 0.0
    %121 = vmatpush1.msra.mxu0 0.0
    %122 = vmatprep.subr.mxu0 0.0
    %123 = vmatpush1.msra.mxu0 0.0
    %124 = vmatprep.subr.mxu0 0.0
    %125 = vmatpush1.msra.mxu0 0.0
    %126 = vmatprep.subr.mxu0 0.0
    %127 = vmatpush1.msra.mxu0 0.0
    %128 = vmatprep.subr.mxu0 0.0
    %129 = vmatpush1.msra.mxu0 0.0
    %130 = vmatprep.subr.mxu0 0.0
    %131 = vmatpush1.msra.mxu0 0.0
    %132 = vmatprep.subr.mxu0 0.0
    %133 = vmatpush1.msra.mxu0 0.0
    %134 = vmatprep.subr.mxu0 0.0
    %135 = vmatpush1.msra.mxu0 0.0
    %136 = vmatprep.subr.mxu0 0.0
    %137 = vmatpush1.msra.mxu0 0.0
    %138 = vmatprep.subr.mxu0 0.0
    %139 = vmatpush1.msra.mxu0 0.0
    %140 = vmatprep.subr.mxu0 0.0
    %141 = vmatpush1.msra.mxu0 0.0
    %142 = vmatprep.subr.mxu0 0.0
    %143 = vmatpush1.msra.mxu0 0.0
    %144 = vmatprep.subr.mxu0 0.0
    %145 = vmatpush1.msra.mxu0 0.0
    %146 = vmatprep.subr.mxu0 0.0
    %147 = vmatpush1.msra.mxu0 0.0
    %148 = vmatprep.subr.mxu0 0.0
    %149 = vmatpush1.msra.mxu0 0.0
    %150 = vmatprep.subr.mxu0 0.0
    %151 = vmatpush1.msra.mxu0 0.0
    %152 = vmatprep.subr.mxu0 0.0
    %153 = vmatpush1.msra.mxu0 0.0
    %154 = vmatprep.subr.mxu0 0.0
    %155 = vmatpush1.msra.mxu0 0.0
    %156 = vmatprep.subr.mxu0 0.0
    %157 = vmatpush1.msra.mxu0 0.0
    %158 = vmatprep.subr.mxu0 0.0
    %159 = vmatpush1.msra.mxu0 0.0
    %160 = vmatprep.subr.mxu0 0.0
    %161 = vmatpush1.msra.mxu0 0.0
    %162 = vmatprep.subr.mxu0 0.0
    %163 = vmatpush1.msra.mxu0 0.0
    %164 = vmatprep.subr.mxu0 0.0
    %165 = vmatpush1.msra.mxu0 0.0
    %166 = vmatprep.subr.mxu0 0.0
    %167 = vmatpush1.msra.mxu0 0.0
    %168 = vmatprep.subr.mxu0 0.0
    %169 = vmatpush1.msra.mxu0 0.0
    %170 = vmatprep.subr.mxu0 0.0
    %171 = vmatpush1.msra.mxu0 0.0
    %172 = vmatprep.subr.mxu0 0.0
    %173 = vmatpush1.msra.mxu0 0.0
    %174 = vmatprep.subr.mxu0 0.0
    %175 = vmatpush1.msra.mxu0 0.0
    %176 = vmatprep.subr.mxu0 0.0
    %177 = vmatpush1.msra.mxu0 0.0
    %178 = vmatprep.mubr.f32.mxu0 0.0
    %179 = vmatmul.mubr.f32.gmra.mrb[0].mxu0 %v98
    %v180 = vpop.f32.mrb[0].mxu0
    %v181 = vadd.f32 %v60, %v180
    %v182 = vpop.f32.mrb[0].mxu0
    %183 = vmatprep.mubr.f32.mxu0 0.0
    %184 = vmatmul.mubr.f32.gmra.mrb[0].mxu0 %v100
    %v185 = vpop.f32.mrb[0].mxu0
    %v186 = vadd.f32 %v65, %v185
    %v187 = vpop.f32.mrb[0].mxu0
    %188 = vmatprep.mubr.f32.mxu0 0.0
    %189 = vmatmul.mubr.f32.gmra.mrb[0].mxu0 %v102
    %v190 = vpop.f32.mrb[0].mxu0
    %v191 = vadd.f32 %v70, %v190
    %v192 = vpop.f32.mrb[0].mxu0
    %193 = vmatprep.mubr.f32.mxu0 0.0
    %194 = vmatmul.mubr.f32.gmra.mrb[0].mxu0 %v104
    %v195 = vpop.f32.mrb[0].mxu0
    %v196 = vadd.f32 %v75, %v195
    %v197 = vpop.f32.mrb[0].mxu0
    %198 = vmatprep.mubr.f32.mxu0 0.0
    %199 = vmatmul.mubr.f32.gmra.mrb[0].mxu0 %v106
    %v200 = vpop.f32.mrb[0].mxu0
    %v201 = vadd.f32 %v80, %v200
    %v202 = vpop.f32.mrb[0].mxu0
    %203 = vmatprep.mubr.f32.mxu0 0.0
    %204 = vmatmul.mubr.f32.gmra.mrb[0].mxu0 %v108
    %v205 = vpop.f32.mrb[0].mxu0
    %v206 = vadd.f32 %v85, %v205
    %v207 = vpop.f32.mrb[0].mxu0
    %208 = vmatprep.mubr.f32.mxu0 0.0
    %209 = vmatmul.mubr.f32.gmra.mrb[0].mxu0 %v110
    %v210 = vpop.f32.mrb[0].mxu0
    %v211 = vadd.f32 %v90, %v210
    %v212 = vpop.f32.mrb[0].mxu0
    %213 = vmatprep.mubr.f32.mxu0 0.0
    %214 = vmatmul.mubr.f32.gmra.mrb[0].mxu0 %v112
    %v215 = vpop.f32.mrb[0].mxu0
    %v216 = vadd.f32 %v95, %v215
    %v217 = vpop.f32.mrb[0].mxu0
    %218 = vdwg.mxu0
    %v219 = vmax.f32 %v181, 0.0
    %v220 = vmax.f32 %v186, 0.0
    %v221 = vmax.f32 %v191, 0.0
    %v222 = vmax.f32 %v196, 0.0
    %v223 = vmax.f32 %v201, 0.0
    %v224 = vmax.f32 %v206, 0.0
    %v225 = vmax.f32 %v211, 0.0
    %v226 = vmax.f32 %v216, 0.0
    %v227 = vmax.f32 %v219, %v223
    %v228 = vmax.f32 %v220, %v224
    %v229 = vmax.f32 %v221, %v225
    %v230 = vmax.f32 %v222, %v226
    %232 = vset.pattern.permute.xlu0 28
    %233 = vperm.xlu0 %232, %v50
    %v234 = vpop.permute.xlu0 %233
    %237 = vset.pattern.permute.xlu0 28
    %238 = vperm.xlu0 %237, %v51
    %v239 = vpop.permute.xlu0 %238
    %242 = vset.pattern.permute.xlu0 28
    %243 = vperm.xlu0 %242, %v52
    %v244 = vpop.permute.xlu0 %243
    %247 = vset.pattern.permute.xlu0 28
    %248 = vperm.xlu0 %247, %v53
    %v249 = vpop.permute.xlu0 %248
    %vm251 = vcmask 228352
    %v252 = vsel %vm251, %v50, 0
    %v254 = vsel %vm251, %v51, 0
    %v256 = vsel %vm251, %v52, 0
    %v258 = vsel %vm251, %v53, 0
    %vm260 = vcmask 1043456
    %v262 = vsel %vm260, %v230, 0
    %264 = vmatprep.subr.mxu0 0.0
    %265 = vmatpush1.msra.mxu0 %v227
    %266 = vmatprep.subr.mxu0 0.0
    %267 = vmatpush1.msra.mxu0 %v228
    %268 = vmatprep.subr.mxu0 0.0
    %269 = vmatpush1.msra.mxu0 %v229
    %270 = vmatprep.subr.mxu0 0.0
    %271 = vmatpush1.msra.mxu0 %v262
    %272 = vmatprep.subr.mxu0 0.0
    %273 = vmatpush1.msra.mxu0 0.0
    %274 = vmatprep.subr.mxu0 0.0
    %275 = vmatpush1.msra.mxu0 0.0
    %276 = vmatprep.subr.mxu0 0.0
    %277 = vmatpush1.msra.mxu0 0.0
    %278 = vmatprep.subr.mxu0 0.0
    %279 = vmatpush1.msra.mxu0 0.0
    %280 = vmatprep.subr.mxu0 0.0
    %281 = vmatpush1.msra.mxu0 0.0
    %282 = vmatprep.subr.mxu0 0.0
    %283 = vmatpush1.msra.mxu0 0.0
    %284 = vmatprep.subr.mxu0 0.0
    %285 = vmatpush1.msra.mxu0 0.0
    %286 = vmatprep.subr.mxu0 0.0
    %287 = vmatpush1.msra.mxu0 0.0
    %288 = vmatprep.subr.mxu0 0.0
    %289 = vmatpush1.msra.mxu0 0.0
    %290 = vmatprep.subr.mxu0 0.0
    %291 = vmatpush1.msra.mxu0 0.0
    %292 = vmatprep.subr.mxu0 0.0
    %293 = vmatpush1.msra.mxu0 0.0
    %294 = vmatprep.subr.mxu0 0.0
    %295 = vmatpush1.msra.mxu0 0.0
    %296 = vmatprep.subr.mxu0 0.0
    %297 = vmatpush1.msra.mxu0 0.0
    %298 = vmatprep.subr.mxu0 0.0
    %299 = vmatpush1.msra.mxu0 0.0
    %300 = vmatprep.subr.mxu0 0.0
    %301 = vmatpush1.msra.mxu0 0.0
    %302 = vmatprep.subr.mxu0 0.0
    %303 = vmatpush1.msra.mxu0 0.0
    %304 = vmatprep.subr.mxu0 0.0
    %305 = vmatpush1.msra.mxu0 0.0
    %306 = vmatprep.subr.mxu0 0.0
    %307 = vmatpush1.msra.mxu0 0.0
    %308 = vmatprep.subr.mxu0 0.0
    %309 = vmatpush1.msra.mxu0 0.0
    %310 = vmatprep.subr.mxu0 0.0
    %311 = vmatpush1.msra.mxu0 0.0
    %312 = vmatprep.subr.mxu0 0.0
    %313 = vmatpush1.msra.mxu0 0.0
    %314 = vmatprep.subr.mxu0 0.0
    %315 = vmatpush1.msra.mxu0 0.0
    %316 = vmatprep.subr.mxu0 0.0
    %317 = vmatpush1.msra.mxu0 0.0
    %318 = vmatprep.subr.mxu0 0.0
    %319 = vmatpush1.msra.mxu0 0.0
    %320 = vmatprep.subr.mxu0 0.0
    %321 = vmatpush1.msra.mxu0 0.0
    %322 = vmatprep.subr.mxu0 0.0
    %323 = vmatpush1.msra.mxu0 0.0
    %324 = vmatprep.subr.mxu0 0.0
    %325 = vmatpush1.msra.mxu0 0.0
    %326 = vmatprep.subr.mxu0 0.0
    %327 = vmatpush1.msra.mxu0 0.0
    %328 = vmatprep.mubr.f32.mxu0 0.0
    %329 = vmatmul.mubr.f32.gmra.mrb[0].mxu0 %v252
    %v330 = vpop.f32.mrb[0].mxu0
    %v331 = vadd.f32 %v234, %v330
    %v332 = vpop.f32.mrb[0].mxu0
    %333 = vmatprep.mubr.f32.mxu0 0.0
    %334 = vmatmul.mubr.f32.gmra.mrb[0].mxu0 %v254
    %v335 = vpop.f32.mrb[0].mxu0
    %v336 = vadd.f32 %v239, %v335
    %v337 = vpop.f32.mrb[0].mxu0
    %338 = vmatprep.mubr.f32.mxu0 0.0
    %339 = vmatmul.mubr.f32.gmra.mrb[0].mxu0 %v256
    %v340 = vpop.f32.mrb[0].mxu0
    %v341 = vadd.f32 %v244, %v340
    %v342 = vpop.f32.mrb[0].mxu0
    %343 = vmatprep.mubr.f32.mxu0 0.0
    %344 = vmatmul.mubr.f32.gmra.mrb[0].mxu0 %v258
    %v345 = vpop.f32.mrb[0].mxu0
    %v346 = vadd.f32 %v249, %v345
    %v347 = vpop.f32.mrb[0].mxu0
    %348 = vdwg.mxu0
    %v349 = vmax.f32 %v331, 0.0
    %v350 = vmax.f32 %v336, 0.0
    %v351 = vmax.f32 %v341, 0.0
    %v352 = vmax.f32 %v346, 0.0
    %v353 = vmax.f32 %v349, %v351
    %v354 = vmax.f32 %v350, %v352
    %356 = vset.pattern.permute.xlu0 0
    %357 = vperm.xlu0 %356, %v54
    %v358 = vpop.permute.xlu0 %357
    %361 = vset.pattern.permute.xlu0 0
    %362 = vperm.xlu0 %361, %v55
    %v363 = vpop.permute.xlu0 %362
    %v365 = vmul.f32 %v353, %v358
    %v366 = vmul.f32 %v354, %v363
    %v367 = vadd.f32 %v365, %v366
    %v368 = vrot.slane %v367, 4
    %v369 = vadd.f32 %v367, %v368
    %v370 = vrot.slane %v369, 2
    %v371 = vadd.f32 %v369, %v370
    %v372 = vrot.slane %v371, 1
    %v373 = vadd.f32 %v371, %v372
    %375 = vset.pattern.permute.xlu0 0
    %376 = vperm.xlu0 %375, %v56
    %v377 = vpop.permute.xlu0 %376
    %v379 = vadd.f32 %v373, %v377
    %v380 = vsub.f32 0.0, %v379
    %v381 = vmul.f32 %v380, 1.442695
    %v382 = vpow.pop %v381
    %v383 = vadd.f32 %v382, 1.0
    %v384 = vrcp.pop %v383
    %385 = vst [vmem:[#allocation7] sm:$0x1] %v384
    // Predicated region
    $region18: #{tpu_custom_call.1} parent=1 // pred_check
      _
    $region19: #{tpu_custom_call.1} parent=1 // pred_check_branch
      %387 = sbr.rel (0) target = $region21
    $region20: #{tpu_custom_call.1} parent=1 // pred_region
      %s389 = ssub.s32 16, 16
      %390 = vsyncadd [#allocation4], %s389
      %s392 = sshll.u32 [#allocation7], 4
      %s393 = int_to_ptr.vmem [resolvable:$true] %s392
      %395 = dma.vmem_to_hbm [thread:$0]  %s393, 16, %s2, [#allocation4]
    $region21: #{tpu_custom_call.1} parent=1 // pred_fallthru
      _
    // Predicated region
    $region22: #{tpu_custom_call.1} parent=1 // pred_check
      _
    $region23: #{tpu_custom_call.1} parent=1 // pred_check_branch
      %397 = sbr.rel (0) target = $region25
    $region24: #{tpu_custom_call.1} parent=1 // pred_region
      %398 = dma.done [#allocation4], 16
    $region25: #{tpu_custom_call.1} parent=1 // pred_fallthru
      _
    %399 = vsyncpa [#allocation3], 1
    %400 = vsyncpa [#allocation6], 1
    %401 = vsyncpa [#allocation4], 1

</llo_original>
